<compile_context>
chip_gen: v5e
topology: v5e:2x2
jax: 0.10.0
libtpu: 0.0.40
codegen_flags: <defaults>
</compile_context>

<pallas_src>
import functools

import jax
import jax.numpy as jnp
from jax.experimental import pallas as pl
from jax.experimental.pallas import tpu as pltpu


# ----------------------------------------------------------------------------
# Pallas kernel: one batch tile per grid step.
#   x_ref : [TB, in_f]   (natural layout)      w1: [H, in_f]  b1: [H, 1]
#                                              w2: [3, H]     b2: [3, 1]
#                                              w3: [out_f, 3] b3: [out_f, 1]
#   o_ref : [out_f, TB]  (batch on the lane axis -> lane-dense stores)
# ----------------------------------------------------------------------------
def fnet_kernel(x_ref, w1_ref, b1_ref, w2_ref, b2_ref, w3_ref, b3_ref, o_ref,
                *, bf16_tanh: bool):
    # Tiny in-kernel transpose: [TB, in_f] -> [in_f, TB].  XLU is otherwise
    # idle here and this hides under the input DMA.
    xT = x_ref[...].T

    act_dtype = jnp.bfloat16 if bf16_tanh else jnp.float32

    # fc1 + tanh -> [H, TB]
    h1 = jnp.dot(w1_ref[...], xT, preferred_element_type=jnp.float32)
    h1 = jnp.tanh((h1 + b1_ref[...]).astype(act_dtype))

    # fc2 + tanh -> [3, TB]
    h2 = jnp.dot(w2_ref[...].astype(act_dtype), h1,
                 preferred_element_type=jnp.float32)
    h2 = jnp.tanh((h2 + b2_ref[...]).astype(act_dtype))

    # fc3 (no activation) -> [out_f, TB]
    h3 = jnp.dot(w3_ref[...].astype(act_dtype), h2,
                 preferred_element_type=jnp.float32)
    o_ref[...] = (h3 + b3_ref[...]).astype(o_ref.dtype)


def fnet_forward(x, params, *, batch_tile=None, bf16_tanh=False):
    """Fused FNet forward pass.

    x      : [batch, input_features]  float32
    params : dict with w1 [H,in], b1 [H,1], w2 [3,H], b2 [3,1], w3 [out,3], b3 [out,1]
    returns: [batch, output_features] float32
    """
    w1, b1 = params["w1"], params["b1"]
    w2, b2 = params["w2"], params["b2"]
    w3, b3 = params["w3"], params["b3"]

    batch, in_f = x.shape
    out_f = w3.shape[0]

    # --- batch tile sizing --------------------------------------------------
    # Lane axis of the output -> tile must be a multiple of 128.
    #  * aim for ~8 grid steps (>= 2 so v7x's two TensorCores both get work),
    #  * cap at 8192 columns: the lane-padded [TB, in_f] x tile costs ~1 KiB
    #    per batch column (double-buffered), keeping VMEM ~10 MiB at the cap.
    if batch_tile is None:
        per_tile = pl.cdiv(batch, 8)
        batch_tile = min(8192, max(128, ((per_tile + 127) // 128) * 128))
    batch_tile = max(128, (batch_tile // 128) * 128)

    # Ragged last tile handled by Pallas boundary-block clipping: OOB reads of
    # the final x block are unspecified, and OOB output columns are discarded
    # on store -- no explicit pad/slice copies.
    grid = (pl.cdiv(batch, batch_tile),)

    # Weights & biases: one full-extent block with a constant index_map ->
    # VMEM-resident (< 2 KiB total), never re-DMA'd.
    resident = lambda a: pl.BlockSpec(a.shape, lambda i: (0, 0))

    kernel = functools.partial(fnet_kernel, bf16_tanh=bf16_tanh)

    outT = pl.pallas_call(
        kernel,
        out_shape=jax.ShapeDtypeStruct((out_f, batch), x.dtype),
        grid=grid,
        in_specs=[
            # x stays in natural [batch, in_f] layout: contiguous blocks.
            pl.BlockSpec((batch_tile, in_f), lambda i: (i, 0)),
            resident(w1), resident(b1),
            resident(w2), resident(b2),
            resident(w3), resident(b3),
        ],
        # Lane-dense [out_f, batch_tile] stores (unmasked vst).
        out_specs=pl.BlockSpec((out_f, batch_tile), lambda i: (0, i)),
        compiler_params=pltpu.CompilerParams(
            # Independent batch tiles -> shard across both TCs on v7x.
            dimension_semantics=("parallel",),
            vmem_limit_bytes=32 * 1024 * 1024,
        ),
    )(x, w1, b1, w2, b2, w3, b3)

    if out_f == 1:
        # [1, batch] has the same linear layout as [batch, 1]: metadata-only.
        return outT.reshape(batch, 1)
    # General fallback for out_f > 1 (costs one extra transpose pass).
    return outT.T


# ----------------------------------------------------------------------------
# Deterministic parameter init matching nn.Linear + xavier_uniform_ on weights.
# Weights stored in PyTorch layout [out_features, in_features]; biases [out, 1].
# ----------------------------------------------------------------------------
def xavier_uniform(key, fan_in, fan_out):
    # torch.nn.init.xavier_uniform_: U(-a, a), a = sqrt(6 / (fan_in + fan_out))
    a = jnp.sqrt(6.0 / (fan_in + fan_out))
    return jax.random.uniform(key, (fan_out, fan_in), jnp.float32, -a, a)


def linear_bias(key, fan_in, fan_out):
    # default nn.Linear bias init: U(-1/sqrt(fan_in), 1/sqrt(fan_in))
    bound = 1.0 / jnp.sqrt(float(fan_in))
    return jax.random.uniform(key, (fan_out, 1), jnp.float32, -bound, bound)


def init_fnet_params(key, input_features, output_features, n_hiddenunits=16):
    k1, k2, k3, k4, k5, k6 = jax.random.split(key, 6)
    return {
        "w1": xavier_uniform(k1, input_features, n_hiddenunits),
        "b1": linear_bias(k2, input_features, n_hiddenunits),
        "w2": xavier_uniform(k3, n_hiddenunits, 3),
        "b2": linear_bias(k4, n_hiddenunits, 3),
        "w3": xavier_uniform(k5, 3, output_features),
        "b3": linear_bias(k6, 3, output_features),
    }


def fnet_reference(x, p):
    h1 = jnp.tanh(x @ p["w1"].T + p["b1"].T)
    h2 = jnp.tanh(h1 @ p["w2"].T + p["b2"].T)
    return h2 @ p["w3"].T + p["b3"].T


# TODO(synk): jacobian()/hessian() helpers from the PyTorch module are autodiff
# utilities around the forward pass and are not translated to Pallas.

if __name__ == "__main__":
    key = jax.random.PRNGKey(0)
    k_param, k_x1, k_x2 = jax.random.split(key, 3)

    input_features = 4
    output_features = 1
    n_hiddenunits = 16

    params = init_fnet_params(k_param, input_features, output_features, n_hiddenunits)

    # Case 1: batch divides evenly, explicit tile -> 2 grid steps (megacore path).
    x1 = jax.random.normal(k_x1, (256, input_features), jnp.float32)
    out1 = jax.block_until_ready(fnet_forward(x1, params, batch_tile=128))
    ref1 = fnet_reference(x1, params)
    assert out1.shape == (256, output_features), out1.shape
    assert jnp.allclose(out1, ref1, atol=1e-5, rtol=1e-5)

    # Case 2: ragged batch (not a multiple of 128) -> boundary-block clipping path.
    x2 = jax.random.normal(k_x2, (200, input_features), jnp.float32)
    out2 = jax.block_until_ready(fnet_forward(x2, params))
    ref2 = fnet_reference(x2, params)
    assert out2.shape == (200, output_features), out2.shape
    assert jnp.allclose(out2, ref2, atol=1e-5, rtol=1e-5)

    # Case 3: bf16 tanh path (EUP lever on v6e/v7x) -> relaxed tolerance.
    out3 = jax.block_until_ready(
        fnet_forward(x1, params, batch_tile=128, bf16_tanh=True))
    assert out3.shape == (256, output_features), out3.shape
    assert float(jnp.max(jnp.abs(out3 - ref1))) < 0.2

    print("KERNEL_OK")
</pallas_src>

<mosaic_0001>
module attributes {stable_mosaic.version = 11 : i64} {
  func.func @fnet_kernel(%arg0: i32, %arg1: memref<128x4xf32, #tpu.memory_space<vmem>>, %arg2: memref<16x4xf32, #tpu.memory_space<vmem>>, %arg3: memref<16x1xf32, #tpu.memory_space<vmem>>, %arg4: memref<3x16xf32, #tpu.memory_space<vmem>>, %arg5: memref<3x1xf32, #tpu.memory_space<vmem>>, %arg6: memref<1x3xf32, #tpu.memory_space<vmem>>, %arg7: memref<1x1xf32, #tpu.memory_space<vmem>>, %arg8: memref<1x128xf32, #tpu.memory_space<vmem>>) attributes {dimension_semantics = [#tpu.dimension_semantics<parallel>], iteration_bounds = array<i64: 2>, scalar_prefetch = 0 : i64, scratch_operands = 0 : i64, tpu.core_type = #tpu.core_type<tc>, window_params = [{transform_indices = @transform_0, window_bounds = array<i64: 128, 4>}, {pipeline_mode = #tpu.pipeline_mode<synchronous>, transform_indices = @transform_1, window_bounds = array<i64: 16, 4>}, {pipeline_mode = #tpu.pipeline_mode<synchronous>, transform_indices = @transform_2, window_bounds = array<i64: 16, 1>}, {pipeline_mode = #tpu.pipeline_mode<synchronous>, transform_indices = @transform_3, window_bounds = array<i64: 3, 16>}, {pipeline_mode = #tpu.pipeline_mode<synchronous>, transform_indices = @transform_4, window_bounds = array<i64: 3, 1>}, {pipeline_mode = #tpu.pipeline_mode<synchronous>, transform_indices = @transform_5, window_bounds = array<i64: 1, 3>}, {pipeline_mode = #tpu.pipeline_mode<synchronous>, transform_indices = @transform_6, window_bounds = array<i64: 1, 1>}, {transform_indices = @transform_7, window_bounds = array<i64: 1, 128>}]} {
    %c0 = arith.constant 0 : index
    %c0_0 = arith.constant 0 : index
    %0 = vector.load %arg1[%c0, %c0_0] : memref<128x4xf32, #tpu.memory_space<vmem>>, vector<128x4xf32>
    %1 = tpu.transpose %0, [1, 0] : vector<128x4xf32> -> vector<4x128xf32>
    %c0_1 = arith.constant 0 : index
    %c0_2 = arith.constant 0 : index
    %2 = vector.load %arg2[%c0_1, %c0_2] : memref<16x4xf32, #tpu.memory_space<vmem>>, vector<16x4xf32>
    %cst = arith.constant dense<0.000000e+00> : vector<16x128xf32>
    %3 = tpu.matmul %2, %1, %cst {dimension_numbers = #tpu.dot_dimension_numbers<[1], [0], [0], [1], [0, 0, 1, 1], [], []>} : vector<16x4xf32>, vector<4x128xf32>, vector<16x128xf32> -> vector<16x128xf32>
    %c0_3 = arith.constant 0 : index
    %c0_4 = arith.constant 0 : index
    %4 = vector.load %arg3[%c0_3, %c0_4] : memref<16x1xf32, #tpu.memory_space<vmem>>, vector<16x1xf32>
    %5 = vector.broadcast %4 : vector<16x1xf32> to vector<16x128xf32>
    %6 = arith.addf %3, %5 : vector<16x128xf32>
    %7 = math.tanh %6 : vector<16x128xf32>
    %c0_5 = arith.constant 0 : index
    %c0_6 = arith.constant 0 : index
    %8 = vector.load %arg4[%c0_5, %c0_6] : memref<3x16xf32, #tpu.memory_space<vmem>>, vector<3x16xf32>
    %cst_7 = arith.constant dense<0.000000e+00> : vector<3x128xf32>
    %9 = tpu.matmul %8, %7, %cst_7 {dimension_numbers = #tpu.dot_dimension_numbers<[1], [0], [0], [1], [0, 0, 1, 1], [], []>} : vector<3x16xf32>, vector<16x128xf32>, vector<3x128xf32> -> vector<3x128xf32>
    %c0_8 = arith.constant 0 : index
    %c0_9 = arith.constant 0 : index
    %10 = vector.load %arg5[%c0_8, %c0_9] : memref<3x1xf32, #tpu.memory_space<vmem>>, vector<3x1xf32>
    %11 = vector.broadcast %10 : vector<3x1xf32> to vector<3x128xf32>
    %12 = arith.addf %9, %11 : vector<3x128xf32>
    %13 = math.tanh %12 : vector<3x128xf32>
    %c0_10 = arith.constant 0 : index
    %c0_11 = arith.constant 0 : index
    %14 = vector.load %arg6[%c0_10, %c0_11] : memref<1x3xf32, #tpu.memory_space<vmem>>, vector<1x3xf32>
    %cst_12 = arith.constant dense<0.000000e+00> : vector<1x128xf32>
    %15 = tpu.matmul %14, %13, %cst_12 {dimension_numbers = #tpu.dot_dimension_numbers<[1], [0], [0], [1], [0, 0, 1, 1], [], []>} : vector<1x3xf32>, vector<3x128xf32>, vector<1x128xf32> -> vector<1x128xf32>
    %c0_13 = arith.constant 0 : index
    %c0_14 = arith.constant 0 : index
    %16 = vector.load %arg7[%c0_13, %c0_14] : memref<1x1xf32, #tpu.memory_space<vmem>>, vector<1x1xf32>
    %17 = vector.broadcast %16 : vector<1x1xf32> to vector<1x128xf32>
    %18 = arith.addf %15, %17 : vector<1x128xf32>
    %c0_15 = arith.constant 0 : index
    %c0_16 = arith.constant 0 : index
    %19 = vector.load %arg8[%c0_15, %c0_16] : memref<1x128xf32, #tpu.memory_space<vmem>>, vector<1x128xf32>
    tpu.vector_store %arg8[%c0_15, %c0_16], %18 {strides = array<i32>} : memref<1x128xf32, #tpu.memory_space<vmem>>, vector<1x128xf32>,
    return
  }
  func.func @transform_0(%arg0: i32) -> (i32, i32) {
    %c0_i32 = arith.constant 0 : i32
    %c0_i32_0 = arith.constant 0 : i32
    return %arg0, %c0_i32 : i32, i32
  }
  func.func @transform_1(%arg0: i32) -> (i32, i32) {
    %c0_i32 = arith.constant 0 : i32
    %c0_i32_0 = arith.constant 0 : i32
    %c0_i32_1 = arith.constant 0 : i32
    return %c0_i32, %c0_i32_0 : i32, i32
  }
  func.func @transform_2(%arg0: i32) -> (i32, i32) {
    %c0_i32 = arith.constant 0 : i32
    %c0_i32_0 = arith.constant 0 : i32
    %c0_i32_1 = arith.constant 0 : i32
    return %c0_i32, %c0_i32_0 : i32, i32
  }
  func.func @transform_3(%arg0: i32) -> (i32, i32) {
    %c0_i32 = arith.constant 0 : i32
    %c0_i32_0 = arith.constant 0 : i32
    %c0_i32_1 = arith.constant 0 : i32
    return %c0_i32, %c0_i32_0 : i32, i32
  }
  func.func @transform_4(%arg0: i32) -> (i32, i32) {
    %c0_i32 = arith.constant 0 : i32
    %c0_i32_0 = arith.constant 0 : i32
    %c0_i32_1 = arith.constant 0 : i32
    return %c0_i32, %c0_i32_0 : i32, i32
  }
  func.func @transform_5(%arg0: i32) -> (i32, i32) {
    %c0_i32 = arith.constant 0 : i32
    %c0_i32_0 = arith.constant 0 : i32
    %c0_i32_1 = arith.constant 0 : i32
    return %c0_i32, %c0_i32_0 : i32, i32
  }
  func.func @transform_6(%arg0: i32) -> (i32, i32) {
    %c0_i32 = arith.constant 0 : i32
    %c0_i32_0 = arith.constant 0 : i32
    %c0_i32_1 = arith.constant 0 : i32
    return %c0_i32, %c0_i32_0 : i32, i32
  }
  func.func @transform_7(%arg0: i32) -> (i32, i32) {
    %c0_i32 = arith.constant 0 : i32
    %c0_i32_0 = arith.constant 0 : i32
    return %c0_i32, %arg0 : i32, i32
  }
}

</mosaic_0001>

<llo_original>
// kernel: tpu_custom_call.1
$region0: #{tpu_custom_call.1}
  #allocation0 [shape = 'u32[]', space=smem, size = 0x4, offset = 0x4, fixed_abs, tag = 'smem constant byte address 0x4 - core index']
  #allocation1 [shape = 'u32[72,128]{1,0:T(1,128)}', space=vmem, size = 0x9000, scoped, tag = 'internal scratch']
  #allocation2 [shape = 'f32[1,1]{1,0:T(1,128)S(1)}', space=vmem, size = 0x200, scoped, tag = 'scoped memory for tpu_custom_call.1']
  %s0 = inlined_call_operand.vmem [shape: f32[256,4], index: 0, kind: input, shape index: {}]
  %s1 = inlined_call_operand.vmem [shape: f32[16,4], index: 1, kind: input, shape index: {}]
  %s2 = inlined_call_operand.vmem [shape: f32[16,1], index: 2, kind: input, shape index: {}]
  %s3 = inlined_call_operand.vmem [shape: f32[3,16], index: 3, kind: input, shape index: {}]
  %s4 = inlined_call_operand.vmem [shape: f32[3,1], index: 4, kind: input, shape index: {}]
  %s5 = inlined_call_operand.vmem [shape: f32[1,3], index: 5, kind: input, shape index: {}]
  %s6 = inlined_call_operand.<no memory space> [shape: f32[1,1], index: 6, kind: input, shape index: {}]
  %s7 = inlined_call_operand.hbm [shape: f32[1,256], index: 7, kind: output, shape index: {}]
  %s8 = sld [smem:[#allocation0]]
  $region61: #{tpu_custom_call.1} parent=0
    _
  %s10 = ssub.s32 1, %s8
  %s11 = scalar_select 0, %s10, %s8
  %v12 = vstv %s6
  %13 = vst [vmem:[#allocation2] sm:$0x1] %v12
  $region1: #{tpu_custom_call.1} parent=0
    #allocation3 [shape = 'u8[1024]{0}', space=vmem, size = 0x400, scoped, tag = 'output window, operand 0']
    #allocation4 [shape = 's32[2]{0}', space=sflag, size = 0x8, scoped, tag = 'scoped memory for tpu_custom_call.1']
    %14 = vsyncpa [#allocation4], 0
    %s15 = scalar_lea.sflag [#allocation4], 1
    %16 = vsyncpa %s15, 0
    loop: start=0, step=1, limit=4
    $region2: #{tpu_custom_call.1} parent=1 // loop_pre_header
      _
    $region3: #{tpu_custom_call.1} parent=1 // loop_header
      %s18 = sphi 0, %s22
      %p19 = scmp.ge.s32.totalorder %s18, 4
      %s28 = sphi 0, %s30
      %s31 = sphi 0, %s28
      %s32 = sphi 0, %s31
      %s48 = sphi 0, %s32
      %s52 = sphi 0, %s52
      %s54 = sphi 0, %s52
      %s55 = sphi 0, %s54
      %s69 = sphi 0, %s55
      %s73 = sphi 0, %s73
      %s75 = sphi 0, %s73
      %s76 = sphi 0, %s75
      %s90 = sphi 0, %s76
      %s94 = sphi 0, %s94
      %s96 = sphi 0, %s94
      %s97 = sphi 0, %s96
      %s111 = sphi 0, %s97
      %s115 = sphi 0, %s115
      %s117 = sphi 0, %s115
      %s118 = sphi 0, %s117
      %s132 = sphi 0, %s118
      %s136 = sphi 0, %s136
      %s138 = sphi 0, %s136
      %s139 = sphi 0, %s138
      %s153 = sphi 0, %s139
      %s157 = sphi 0, %s157
      %s159 = sphi 0, %s157
      %s160 = sphi 0, %s159
      %s174 = sphi 0, %s160
      %s180 = sphi 0, %s182
      %s183 = sphi 0, %s180
      %s184 = sphi 0, %s183
      %s200 = sphi 0, %s184
    $region4: #{tpu_custom_call.1} parent=1 // loop_header_branch
      %21 = sbr.rel (%p19) target = $region8
    $region5: #{tpu_custom_call.1} parent=1 // loop_body
      %s23 = ssub.s32 %s18, 1
      %s24 = ssub.s32 %s18, 2
      %s25 = sadd.s32 %s18, 1
      %s26 = ssub.s32 %s18, %s25
      %p27 = scmp.eq.s32.totalorder %s26, 0
      %s29 = sadd.s32 %s28, 1
      %s30 = scalar_select %p27, %s28, %s29
      %p33 = pneg %p27
      %p34 = scmp.eq.s32.totalorder %s18, 1
      %p35 = por %p33, %p34
      %p36 = scmp.ne.s32.totalorder %s28, %s31
      %p37 = scmp.eq.s32.totalorder %s18, 0
      %p38 = por %p36, %p37
      %p39 = scmp.ne.s32.totalorder %s28, %s31
      %p40 = scmp.eq.s32.totalorder %s23, 1
      %p41 = por %p39, %p40
      %p42 = scmp.ne.s32.totalorder %s31, %s32
      %p43 = scmp.eq.s32.totalorder %s23, 0
      %p44 = por %p42, %p43
      %p45 = scmp.ne.s32.totalorder %s31, %s32
      %p46 = scmp.eq.s32.totalorder %s24, 1
      %p47 = por %p45, %p46
      %p49 = scmp.ne.s32.totalorder %s32, %s48
      %p50 = scmp.eq.s32.totalorder %s24, 0
      %p51 = por %p49, %p50
      %s53 = sadd.s32 %s52, 1
      %p56 = scmp.eq.s32.totalorder %s18, 1
      %p57 = scmp.ne.s32.totalorder %s52, %s54
      %p58 = scmp.eq.s32.totalorder %s18, 0
      %p59 = por %p57, %p58
      %p60 = scmp.ne.s32.totalorder %s52, %s54
      %p61 = scmp.eq.s32.totalorder %s23, 1
      %p62 = por %p60, %p61
      %p63 = scmp.ne.s32.totalorder %s54, %s55
      %p64 = scmp.eq.s32.totalorder %s23, 0
      %p65 = por %p63, %p64
      %p66 = scmp.ne.s32.totalorder %s54, %s55
      %p67 = scmp.eq.s32.totalorder %s24, 1
      %p68 = por %p66, %p67
      %p70 = scmp.ne.s32.totalorder %s55, %s69
      %p71 = scmp.eq.s32.totalorder %s24, 0
      %p72 = por %p70, %p71
      %s74 = sadd.s32 %s73, 1
      %p77 = scmp.eq.s32.totalorder %s18, 1
      %p78 = scmp.ne.s32.totalorder %s73, %s75
      %p79 = scmp.eq.s32.totalorder %s18, 0
      %p80 = por %p78, %p79
      %p81 = scmp.ne.s32.totalorder %s73, %s75
      %p82 = scmp.eq.s32.totalorder %s23, 1
      %p83 = por %p81, %p82
      %p84 = scmp.ne.s32.totalorder %s75, %s76
      %p85 = scmp.eq.s32.totalorder %s23, 0
      %p86 = por %p84, %p85
      %p87 = scmp.ne.s32.totalorder %s75, %s76
      %p88 = scmp.eq.s32.totalorder %s24, 1
      %p89 = por %p87, %p88
      %p91 = scmp.ne.s32.totalorder %s76, %s90
      %p92 = scmp.eq.s32.totalorder %s24, 0
      %p93 = por %p91, %p92
      %s95 = sadd.s32 %s94, 1
      %p98 = scmp.eq.s32.totalorder %s18, 1
      %p99 = scmp.ne.s32.totalorder %s94, %s96
      %p100 = scmp.eq.s32.totalorder %s18, 0
      %p101 = por %p99, %p100
      %p102 = scmp.ne.s32.totalorder %s94, %s96
      %p103 = scmp.eq.s32.totalorder %s23, 1
      %p104 = por %p102, %p103
      %p105 = scmp.ne.s32.totalorder %s96, %s97
      %p106 = scmp.eq.s32.totalorder %s23, 0
      %p107 = por %p105, %p106
      %p108 = scmp.ne.s32.totalorder %s96, %s97
      %p109 = scmp.eq.s32.totalorder %s24, 1
      %p110 = por %p108, %p109
      %p112 = scmp.ne.s32.totalorder %s97, %s111
      %p113 = scmp.eq.s32.totalorder %s24, 0
      %p114 = por %p112, %p113
      %s116 = sadd.s32 %s115, 1
      %p119 = scmp.eq.s32.totalorder %s18, 1
      %p120 = scmp.ne.s32.totalorder %s115, %s117
      %p121 = scmp.eq.s32.totalorder %s18, 0
      %p122 = por %p120, %p121
      %p123 = scmp.ne.s32.totalorder %s115, %s117
      %p124 = scmp.eq.s32.totalorder %s23, 1
      %p125 = por %p123, %p124
      %p126 = scmp.ne.s32.totalorder %s117, %s118
      %p127 = scmp.eq.s32.totalorder %s23, 0
      %p128 = por %p126, %p127
      %p129 = scmp.ne.s32.totalorder %s117, %s118
      %p130 = scmp.eq.s32.totalorder %s24, 1
      %p131 = por %p129, %p130
      %p133 = scmp.ne.s32.totalorder %s118, %s132
      %p134 = scmp.eq.s32.totalorder %s24, 0
      %p135 = por %p133, %p134
      %s137 = sadd.s32 %s136, 1
      %p140 = scmp.eq.s32.totalorder %s18, 1
      %p141 = scmp.ne.s32.totalorder %s136, %s138
      %p142 = scmp.eq.s32.totalorder %s18, 0
      %p143 = por %p141, %p142
      %p144 = scmp.ne.s32.totalorder %s136, %s138
      %p145 = scmp.eq.s32.totalorder %s23, 1
      %p146 = por %p144, %p145
      %p147 = scmp.ne.s32.totalorder %s138, %s139
      %p148 = scmp.eq.s32.totalorder %s23, 0
      %p149 = por %p147, %p148
      %p150 = scmp.ne.s32.totalorder %s138, %s139
      %p151 = scmp.eq.s32.totalorder %s24, 1
      %p152 = por %p150, %p151
      %p154 = scmp.ne.s32.totalorder %s139, %s153
      %p155 = scmp.eq.s32.totalorder %s24, 0
      %p156 = por %p154, %p155
      %s158 = sadd.s32 %s157, 1
      %p161 = scmp.eq.s32.totalorder %s18, 1
      %p162 = scmp.ne.s32.totalorder %s157, %s159
      %p163 = scmp.eq.s32.totalorder %s18, 0
      %p164 = por %p162, %p163
      %p165 = scmp.ne.s32.totalorder %s157, %s159
      %p166 = scmp.eq.s32.totalorder %s23, 1
      %p167 = por %p165, %p166
      %p168 = scmp.ne.s32.totalorder %s159, %s160
      %p169 = scmp.eq.s32.totalorder %s23, 0
      %p170 = por %p168, %p169
      %p171 = scmp.ne.s32.totalorder %s159, %s160
      %p172 = scmp.eq.s32.totalorder %s24, 1
      %p173 = por %p171, %p172
      %p175 = scmp.ne.s32.totalorder %s160, %s174
      %p176 = scmp.eq.s32.totalorder %s24, 0
      %p177 = por %p175, %p176
      %s178 = ssub.s32 %s18, %s25
      %p179 = scmp.eq.s32.totalorder %s178, 0
      %s181 = sadd.s32 %s180, 1
      %s182 = scalar_select %p179, %s180, %s181
      %p185 = pneg %p179
      %p186 = scmp.eq.s32.totalorder %s18, 1
      %p187 = por %p185, %p186
      %p188 = scmp.ne.s32.totalorder %s180, %s183
      %p189 = scmp.eq.s32.totalorder %s18, 0
      %p190 = por %p188, %p189
      %p191 = scmp.ne.s32.totalorder %s180, %s183
      %p192 = scmp.eq.s32.totalorder %s23, 1
      %p193 = por %p191, %p192
      %p194 = scmp.ne.s32.totalorder %s183, %s184
      %p195 = scmp.eq.s32.totalorder %s23, 0
      %p196 = por %p194, %p195
      %p197 = scmp.ne.s32.totalorder %s183, %s184
      %p198 = scmp.eq.s32.totalorder %s24, 1
      %p199 = por %p197, %p198
      %p201 = scmp.ne.s32.totalorder %s184, %s200
      %p202 = scmp.eq.s32.totalorder %s24, 0
      %p203 = por %p201, %p202
      %p204 = scmp.le.s32.totalorder 1, %s18
      %p205 = scmp.lt.s32.totalorder %s18, 3
      %p206 = pnand %p204, %p205
      %p207 = pneg %p206
      // Predicated region
      $region9: #{tpu_custom_call.1} parent=5 // pred_check
        _
      $region10: #{tpu_custom_call.1} parent=5 // pred_check_branch
        %209 = sbr.rel (%p206) target = $region12
      $region11: #{tpu_custom_call.1} parent=5 // pred_region
        %s210 = ssub.s32 %s18, 1
        // Predicated region
        $region13: #{tpu_custom_call.1} parent=11 // pred_check
          %p211 = pneg %p65
        $region14: #{tpu_custom_call.1} parent=11 // pred_check_branch
          %213 = sbr.rel (%p211) target = $region16
        $region15: #{tpu_custom_call.1} parent=11 // pred_region
          _
        $region16: #{tpu_custom_call.1} parent=11 // pred_fallthru
          _
        // Predicated region
        $region17: #{tpu_custom_call.1} parent=11 // pred_check
          %p214 = pneg %p86
        $region18: #{tpu_custom_call.1} parent=11 // pred_check_branch
          %216 = sbr.rel (%p214) target = $region20
        $region19: #{tpu_custom_call.1} parent=11 // pred_region
          _
        $region20: #{tpu_custom_call.1} parent=11 // pred_fallthru
          _
        // Predicated region
        $region21: #{tpu_custom_call.1} parent=11 // pred_check
          %p217 = pneg %p107
        $region22: #{tpu_custom_call.1} parent=11 // pred_check_branch
          %219 = sbr.rel (%p217) target = $region24
        $region23: #{tpu_custom_call.1} parent=11 // pred_region
          _
        $region24: #{tpu_custom_call.1} parent=11 // pred_fallthru
          _
        // Predicated region
        $region25: #{tpu_custom_call.1} parent=11 // pred_check
          %p220 = pneg %p128
        $region26: #{tpu_custom_call.1} parent=11 // pred_check_branch
          %222 = sbr.rel (%p220) target = $region28
        $region27: #{tpu_custom_call.1} parent=11 // pred_region
          _
        $region28: #{tpu_custom_call.1} parent=11 // pred_fallthru
          _
        // Predicated region
        $region29: #{tpu_custom_call.1} parent=11 // pred_check
          %p223 = pneg %p149
        $region30: #{tpu_custom_call.1} parent=11 // pred_check_branch
          %225 = sbr.rel (%p223) target = $region32
        $region31: #{tpu_custom_call.1} parent=11 // pred_region
          _
        $region32: #{tpu_custom_call.1} parent=11 // pred_fallthru
          _
        // Predicated region
        $region33: #{tpu_custom_call.1} parent=11 // pred_check
          %p226 = pneg %p170
        $region34: #{tpu_custom_call.1} parent=11 // pred_check_branch
          %228 = sbr.rel (%p226) target = $region36
        $region35: #{tpu_custom_call.1} parent=11 // pred_region
          _
        $region36: #{tpu_custom_call.1} parent=11 // pred_fallthru
          _
      $region12: #{tpu_custom_call.1} parent=5 // pred_fallthru
        _
      %p229 = scmp.lt.s32.totalorder %s18, 2
      // Predicated region
      $region37: #{tpu_custom_call.1} parent=5 // pred_check
        %p230 = pneg %p229
      $region38: #{tpu_custom_call.1} parent=5 // pred_check_branch
        %232 = sbr.rel (%p230) target = $region40
      $region39: #{tpu_custom_call.1} parent=5 // pred_region
        // Predicated region
        $region41: #{tpu_custom_call.1} parent=39 // pred_check
          %p233 = pneg %p38
        $region42: #{tpu_custom_call.1} parent=39 // pred_check_branch
          %235 = sbr.rel (%p233) target = $region44
        $region43: #{tpu_custom_call.1} parent=39 // pred_region
          %s236 = smul.u32 16, %s18
          %p237 = scmp.lt.s32.totalorder %s236, 31
          %s238 = scalar_select %p237, %s236, 31
          %s239 = smul.addr %s238, 8
          %s240 = scalar_lea.vmem %s0, %s239
          %s241 = smul.u32 16, %s18
        $region44: #{tpu_custom_call.1} parent=39 // pred_fallthru
          _
      $region40: #{tpu_custom_call.1} parent=5 // pred_fallthru
        _
      %p242 = scmp.le.s32.totalorder 1, %s18
      %p243 = scmp.lt.s32.totalorder %s18, 3
      %p244 = pnand %p242, %p243
      %p245 = pneg %p244
      // Predicated region
      $region45: #{tpu_custom_call.1} parent=5 // pred_check
        _
      $region46: #{tpu_custom_call.1} parent=5 // pred_check_branch
        %247 = sbr.rel (%p244) target = $region48
      $region47: #{tpu_custom_call.1} parent=5 // pred_region
        %s248 = ssub.s32 %s18, 1
        %s249 = smul.u32 16, %s23
        %p250 = scmp.lt.s32.totalorder %s249, 31
        %s251 = scalar_select %p250, %s249, 31
        %s252 = smul.addr %s251, 8
        %s253 = scalar_lea.vmem %s0, %s252
        %p254 = pneg %p44
        %p255 = pneg %p41
        %p256 = pneg %p65
        %p257 = pneg %p62
        %p258 = pneg %p86
        %p259 = pneg %p83
        %p260 = pneg %p107
        %p261 = pneg %p104
        %p262 = pneg %p128
        %p263 = pneg %p125
        %p264 = pneg %p149
        %p265 = pneg %p146
        %p266 = pneg %p170
        %p267 = pneg %p167
        %p268 = pneg %p196
        %p269 = pneg %p193
        %s270 = sand.u32 %s183, 1
        %s271 = scalar_lea.sflag [#allocation4], %s270
        %s272 = sand.u32 %s183, 1
        %s273 = scalar_lea.vmem [#allocation3], %s272
        %s274 = smul.u32 16, %s23
        %p275 = scmp.lt.s32.totalorder %s274, 31
        %s276 = scalar_select %p275, %s274, 31
        %s277 = smul.addr %s276, 8
        %s278 = scalar_lea.vmem %s0, %s277
        %s279 = smul.u32 16, %s23
        %v280 = vld [vmem:[%s278] sm:$0xff]
        %v281 = vld [vmem:[%s278 + $0x8] sm:$0xff]
        %v282 = vld [vmem:[%s278 + $0x10] sm:$0xff]
        %v283 = vld [vmem:[%s278 + $0x18] sm:$0xff]
        %v284 = vld [vmem:[%s278 + $0x20] sm:$0xff]
        %v285 = vld [vmem:[%s278 + $0x28] sm:$0xff]
        %v286 = vld [vmem:[%s278 + $0x30] sm:$0xff]
        %v287 = vld [vmem:[%s278 + $0x38] sm:$0xff]
        %v288 = vld [vmem:[%s278 + $0x40] sm:$0xff]
        %v289 = vld [vmem:[%s278 + $0x48] sm:$0xff]
        %v290 = vld [vmem:[%s278 + $0x50] sm:$0xff]
        %v291 = vld [vmem:[%s278 + $0x58] sm:$0xff]
        %v292 = vld [vmem:[%s278 + $0x60] sm:$0xff]
        %v293 = vld [vmem:[%s278 + $0x68] sm:$0xff]
        %v294 = vld [vmem:[%s278 + $0x70] sm:$0xff]
        %v295 = vld [vmem:[%s278 + $0x78] sm:$0xff]
        %v296 = vld [vmem:[%s1] sm:$0xff]
        %v297 = vld [vmem:[%s1 + $0x8] sm:$0xff]
        %v298 = vld [vmem:[%s2] sm:$0xff]
        %v299 = vld [vmem:[%s2 + $0x8] sm:$0xff]
        %301 = vset.pattern.permute.xlu0 0
        %302 = vperm.xlu0 %301, %v298
        %v303 = vpop.permute.xlu0 %302
        %306 = vset.pattern.permute.xlu0 0
        %307 = vperm.xlu0 %306, %v299
        %v308 = vpop.permute.xlu0 %307
        %vm310 = vcmask 31744
        %v312 = vsel %vm310, %v296, 0
        %v315 = vsel %vm310, %v297, 0
        %v318 = vsel %vm310, %v280, 0
        %v321 = vsel %vm310, %v281, 0
        %v324 = vsel %vm310, %v282, 0
        %v327 = vsel %vm310, %v283, 0
        %v330 = vsel %vm310, %v284, 0
        %v333 = vsel %vm310, %v285, 0
        %v336 = vsel %vm310, %v286, 0
        %v339 = vsel %vm310, %v287, 0
        %v342 = vsel %vm310, %v288, 0
        %v345 = vsel %vm310, %v289, 0
        %v348 = vsel %vm310, %v290, 0
        %v351 = vsel %vm310, %v291, 0
        %v354 = vsel %vm310, %v292, 0
        %v357 = vsel %vm310, %v293, 0
        %v360 = vsel %vm310, %v294, 0
        %v363 = vsel %vm310, %v295, 0
        %365 = vmatpush.xpose.msra.mxu0 %v363
        %366 = vmatpush.xpose.msra.mxu0 %v360
        %367 = vmatpush.xpose.msra.mxu0 %v357
        %368 = vmatpush.xpose.msra.mxu0 %v354
        %369 = vmatpush.xpose.msra.mxu0 %v351
        %370 = vmatpush.xpose.msra.mxu0 %v348
        %371 = vmatpush.xpose.msra.mxu0 %v345
        %372 = vmatpush.xpose.msra.mxu0 %v342
        %373 = vmatpush.xpose.msra.mxu0 %v339
        %374 = vmatpush.xpose.msra.mxu0 %v336
        %375 = vmatpush.xpose.msra.mxu0 %v333
        %376 = vmatpush.xpose.msra.mxu0 %v330
        %377 = vmatpush.xpose.msra.mxu0 %v327
        %378 = vmatpush.xpose.msra.mxu0 %v324
        %379 = vmatpush.xpose.msra.mxu0 %v321
        %380 = vmatpush.xpose.msra.mxu0 %v318
        %381 = vmatmul.f32.gmra.mxu0 %v312
        %v382 = vpop.f32.mrf.mxu0
        %v383 = vadd.f32 %v303, %v382
        %384 = vmatmul.f32.gmra.mxu0 %v315
        %v385 = vpop.f32.mrf.mxu0
        %v386 = vadd.f32 %v308, %v385
        %387 = vdwg.mxu0
        %v388 = vtanh.pop %v383
        %v389 = vtanh.pop %v386
        %v390 = vld [vmem:[%s3] sm:$0x7]
        %v391 = vld [vmem:[%s4] sm:$0x7]
        %393 = vset.pattern.permute.xlu0 0
        %394 = vperm.xlu0 %393, %v391
        %v395 = vpop.permute.xlu0 %394
        %vm397 = vcmask 130048
        %v399 = vsel %vm397, %v390, 0
        %401 = vmatpush.msra.mxu0 0.0
        %402 = vmatpush.msra.mxu0 0.0
        %403 = vmatpush.msra.mxu0 0.0
        %404 = vmatpush.msra.mxu0 0.0
        %405 = vmatpush.msra.mxu0 0.0
        %406 = vmatpush.msra.mxu0 0.0
        %407 = vmatpush.msra.mxu0 0.0
        %408 = vmatpush.msra.mxu0 0.0
        %409 = vmatpush.msra.mxu0 0.0
        %410 = vmatpush.msra.mxu0 0.0
        %411 = vmatpush.msra.mxu0 0.0
        %412 = vmatpush.msra.mxu0 0.0
        %413 = vmatpush.msra.mxu0 0.0
        %414 = vmatpush.msra.mxu0 0.0
        %415 = vmatpush.msra.mxu0 %v389
        %416 = vmatpush.msra.mxu0 %v388
        %417 = vmatmul.f32.gmra.mxu0 %v399
        %v418 = vpop.f32.mrf.mxu0
        %v419 = vadd.f32 %v395, %v418
        %420 = vdwg.mxu0
        %v421 = vtanh.pop %v419
        %v422 = vld [vmem:[%s5] sm:$0x1]
        %v423 = vld [vmem:[#allocation2] sm:$0x1]
        %425 = vset.pattern.permute.xlu0 0
        %426 = vperm.xlu0 %425, %v423
        %v427 = vpop.permute.xlu0 %426
        %v429 = vperm.slane %v427, 0
        %vm430 = vcmask 23552
        %v432 = vsel %vm430, %v422, 0
        %vm434 = vcmask 1042432
        %v436 = vsel %vm434, %v421, 0
        %438 = vmatpush.msra.mxu0 0.0
        %439 = vmatpush.msra.mxu0 0.0
        %440 = vmatpush.msra.mxu0 0.0
        %441 = vmatpush.msra.mxu0 0.0
        %442 = vmatpush.msra.mxu0 0.0
        %443 = vmatpush.msra.mxu0 0.0
        %444 = vmatpush.msra.mxu0 0.0
        %445 = vmatpush.msra.mxu0 0.0
        %446 = vmatpush.msra.mxu0 0.0
        %447 = vmatpush.msra.mxu0 0.0
        %448 = vmatpush.msra.mxu0 0.0
        %449 = vmatpush.msra.mxu0 0.0
        %450 = vmatpush.msra.mxu0 0.0
        %451 = vmatpush.msra.mxu0 0.0
        %452 = vmatpush.msra.mxu0 0.0
        %453 = vmatpush.msra.mxu0 %v436
        %454 = vmatmul.f32.gmra.mxu0 %v432
        %v455 = vpop.f32.mrf.mxu0
        %v456 = vadd.f32 %v429, %v455
        %457 = vdwg.mxu0
        %458 = vst [vmem:[%s273] sm:$0x1] %v456
        %s459 = sand.u32 %s183, 1
        %s460 = scalar_lea.sflag [#allocation4], %s459
        %s461 = sand.u32 %s183, 1
        %s462 = scalar_lea.vmem [#allocation3], %s461
        // Predicated region
        $region49: #{tpu_custom_call.1} parent=47 // pred_check
          %p463 = pneg %p193
        $region50: #{tpu_custom_call.1} parent=47 // pred_check_branch
          %465 = sbr.rel (%p463) target = $region52
        $region51: #{tpu_custom_call.1} parent=47 // pred_region
          %467 = vsyncadd %s460, 0
          %s468 = scalar_lea.hbm %s7, %s23
          %s470 = sshll.u32 %s462, 4
          %s471 = int_to_ptr.vmem [resolvable:$true] %s470
          %s472 = sshll.u32 %s468, 4
          %s473 = int_to_ptr.hbm [resolvable:$true] %s472
          %475 = dma.vmem_to_hbm [thread:$0]  %s471, 16, %s473, %s460
        $region52: #{tpu_custom_call.1} parent=47 // pred_fallthru
          _
      $region48: #{tpu_custom_call.1} parent=5 // pred_fallthru
        _
      %p476 = scmp.le.s32.totalorder 2, %s18
      // Predicated region
      $region53: #{tpu_custom_call.1} parent=5 // pred_check
        %p477 = pneg %p476
      $region54: #{tpu_custom_call.1} parent=5 // pred_check_branch
        %479 = sbr.rel (%p477) target = $region56
      $region55: #{tpu_custom_call.1} parent=5 // pred_region
        %s480 = ssub.s32 %s18, 2
        // Predicated region
        $region57: #{tpu_custom_call.1} parent=55 // pred_check
          %p481 = pneg %p199
        $region58: #{tpu_custom_call.1} parent=55 // pred_check_branch
          %483 = sbr.rel (%p481) target = $region60
        $region59: #{tpu_custom_call.1} parent=55 // pred_region
          %s484 = sand.u32 %s184, 1
          %s485 = scalar_lea.sflag [#allocation4], %s484
          %s486 = sand.u32 %s184, 1
          %s487 = scalar_lea.vmem [#allocation3], %s486
          %489 = dma.done %s485, 16
        $region60: #{tpu_custom_call.1} parent=55 // pred_fallthru
          _
      $region56: #{tpu_custom_call.1} parent=5 // pred_fallthru
        _
    $region6: #{tpu_custom_call.1} parent=1 // loop_footer
      %s22 = sadd.s32 1, %s18
    $region7: #{tpu_custom_call.1} parent=1 // loop_footer_branch
      %17 = sbr.rel target = $region3
    $region8: #{tpu_custom_call.1} parent=1 // loop_exit
      _
    %490 = vsyncpa [#allocation4], 1
    %s491 = scalar_lea.sflag [#allocation4], 1
    %492 = vsyncpa %s491, 1

</llo_original>
